<compile_context>
chip_gen: v7x
topology: tpu7x:2x2x1
jax: 0.10.0
libtpu: 0.0.40
codegen_flags: <defaults>
</compile_context>

<pallas_src>
import jax
import jax.numpy as jnp
from jax.experimental import pallas as pl
from jax.experimental.pallas import tpu as pltpu

_LANES = 128          # vreg lane width
_SUBLANES = 8         # vreg sublane count (f32)
_MAX_TILE_ROWS = 1024 # (1024, 128) f32 = 512 KiB per buffer


def _copy_kernel(x_ref, o_ref):
    # Pure pass-through of one lane-dense (TILE_ROWS, 128) block.
    o_ref[...] = x_ref[...]


def _slab_geometry(total_elems: int):
    """Lane-dense slab geometry: (rows, tile_rows) with tile_rows | rows."""
    rows = pl.cdiv(total_elems, _LANES)
    # Round rows up to a full vreg sublane group.
    rows = ((rows + _SUBLANES - 1) // _SUBLANES) * _SUBLANES
    tile_rows = min(rows, _MAX_TILE_ROWS)
    # Round rows up so the grid divides evenly (copy of zero padding is cheap
    # and keeps every block full / unmasked).
    rows = ((rows + tile_rows - 1) // tile_rows) * tile_rows
    return rows, tile_rows


@jax.jit
def vis_transformer_forward(x: jax.Array) -> jax.Array:
    """Pallas implementation of VisTransformer.forward.

    # TODO(synk): the reference forward() is literally `pass` (returns None);
    # the identity pass-through below is the closest runnable data path.
    """
    orig_shape = x.shape
    total = x.size
    itemsize = jnp.dtype(x.dtype).itemsize

    rows, tile_rows = _slab_geometry(total)
    padded_total = rows * _LANES

    flat = x.reshape(total)
    if padded_total != total:
        flat = jnp.pad(flat, (0, padded_total - total))
    slab = flat.reshape(rows, _LANES)

    out_slab = pl.pallas_call(
        _copy_kernel,
        out_shape=jax.ShapeDtypeStruct((rows, _LANES), x.dtype),
        grid=(rows // tile_rows,),
        in_specs=[pl.BlockSpec((tile_rows, _LANES), lambda i: (i, 0))],
        out_specs=pl.BlockSpec((tile_rows, _LANES), lambda i: (i, 0)),
        cost_estimate=pl.CostEstimate(
            flops=0,
            transcendentals=0,
            bytes_accessed=2 * padded_total * itemsize,
        ),
        compiler_params=pltpu.CompilerParams(
            # Independent row tiles: shard across both TCs on v7x.
            dimension_semantics=("parallel",),
        ),
    )(slab)

    return out_slab.reshape(padded_total)[:total].reshape(orig_shape)


if __name__ == "__main__":
    key = jax.random.PRNGKey(0)
    # Small NCHW input consistent with a vision-transformer style module.
    x = jax.random.normal(key, (2, 4, 16, 16), dtype=jnp.float32)

    out = vis_transformer_forward(x)
    out = jax.block_until_ready(out)

    # Sanity check: identity semantics.
    assert out.shape == x.shape and out.dtype == x.dtype
    assert bool(jnp.array_equal(out, x))

    print("KERNEL_OK")
</pallas_src>

<mosaic_0001>
module attributes {stable_mosaic.version = 11 : i64} {
  func.func @_copy_kernel(%arg0: i32, %arg1: memref<16x128xf32, #tpu.memory_space<vmem>>, %arg2: memref<16x128xf32, #tpu.memory_space<vmem>>) attributes {dimension_semantics = [#tpu.dimension_semantics<parallel>], iteration_bounds = array<i64: 1>, scalar_prefetch = 0 : i64, scratch_operands = 0 : i64, tpu.core_type = #tpu.core_type<tc>, window_params = [{transform_indices = @transform_0, window_bounds = array<i64: 16, 128>}, {transform_indices = @transform_1, window_bounds = array<i64: 16, 128>}]} {
    %c0 = arith.constant 0 : index
    %c0_0 = arith.constant 0 : index
    %0 = vector.load %arg1[%c0, %c0_0] : memref<16x128xf32, #tpu.memory_space<vmem>>, vector<16x128xf32>
    %c0_1 = arith.constant 0 : index
    %c0_2 = arith.constant 0 : index
    %1 = vector.load %arg2[%c0_1, %c0_2] : memref<16x128xf32, #tpu.memory_space<vmem>>, vector<16x128xf32>
    tpu.vector_store %arg2[%c0_1, %c0_2], %0 {strides = array<i32>} : memref<16x128xf32, #tpu.memory_space<vmem>>, vector<16x128xf32>,
    return
  }
  func.func @transform_0(%arg0: i32) -> (i32, i32) {
    %c0_i32 = arith.constant 0 : i32
    %c0_i32_0 = arith.constant 0 : i32
    return %arg0, %c0_i32 : i32, i32
  }
  func.func @transform_1(%arg0: i32) -> (i32, i32) {
    %c0_i32 = arith.constant 0 : i32
    %c0_i32_0 = arith.constant 0 : i32
    return %arg0, %c0_i32 : i32, i32
  }
}

</mosaic_0001>

<llo_original>
// kernel: vis_transformer_forward.1
$region0: #{vis_transformer_forward.1}
  #allocation0 [shape = 'u32[]', space=smem, size = 0x4, offset = 0x4, fixed_abs, tag = 'smem constant byte address 0x4 - core index']
  #allocation1 [shape = 'u32[144,128]{1,0:T(1,128)}', space=vmem, size = 0x12000, scoped, tag = 'internal scratch']
  %s0 = inlined_call_operand.vmem [shape: f32[16,128], index: 0, kind: input, shape index: {}]
  %s1 = inlined_call_operand.vmem [shape: f32[16,128], index: 1, kind: output, shape index: {}]
  %s2 = sld [smem:[#allocation0]]
  $region14: #{vis_transformer_forward.1} parent=0
    _
  %s4 = ssub.s32 1, %s2
  %s5 = scalar_select 0, %s4, %s2
  // Predicated region
  $region2: #{vis_transformer_forward.1} parent=0 // pred_check
    _
  $region3: #{vis_transformer_forward.1} parent=0 // pred_check_branch
    %7 = sbr.rel (0) target = $region5
  $region4: #{vis_transformer_forward.1} parent=0 // pred_region
    _
  $region5: #{vis_transformer_forward.1} parent=0 // pred_fallthru
    _
  %v8 = vld [vmem:[%s0] sm:$0xff]
  %v9 = vld [vmem:[%s0 + $0x8] sm:$0xff]
  %10 = vst [vmem:[%s1] sm:$0xff] %v8
  %11 = vst [vmem:[%s1 + $0x8] sm:$0xff] %v9
  // Predicated region
  $region6: #{vis_transformer_forward.1} parent=0 // pred_check
    _
  $region7: #{vis_transformer_forward.1} parent=0 // pred_check_branch
    %13 = sbr.rel (0) target = $region9
  $region8: #{vis_transformer_forward.1} parent=0 // pred_region
    _
  $region9: #{vis_transformer_forward.1} parent=0 // pred_fallthru
    _
  // Predicated region
  $region10: #{vis_transformer_forward.1} parent=0 // pred_check
    _
  $region11: #{vis_transformer_forward.1} parent=0 // pred_check_branch
    %15 = sbr.rel (0) target = $region13
  $region12: #{vis_transformer_forward.1} parent=0 // pred_region
    _
  $region13: #{vis_transformer_forward.1} parent=0 // pred_fallthru
    _

</llo_original>
